<compile_context>
chip_gen: v7x
topology: tpu7x:2x2x1
jax: 0.10.0
libtpu: 0.0.40
codegen_flags: <defaults>
</compile_context>

<pallas_src>
import functools

import jax
import jax.numpy as jnp
from jax import lax
from jax.experimental import pallas as pl
from jax.experimental.pallas import tpu as pltpu

BN_EPS = 1e-5
TINY_F32 = 1.1754943508222875e-38  # torch.finfo(torch.float32).tiny (NTXentLoss small_val)
MASK_VAL = -1e30                   # finite "minus infinity" for masking (no -inf NaN traps)
VMEM_LIMIT = 48 * 1024 * 1024      # > 16/32 MiB scoped defaults, < 64 MiB v7x physical


# ---------------------------------------------------------------------------
# Stage 1a: gridded Linear  (bf16 MXU operands, f32 accumulation into the output)
# ---------------------------------------------------------------------------
def _linear_kernel(x_ref, w_ref, b_ref, z_ref):
    k = pl.program_id(1)
    acc = jnp.dot(x_ref[...], w_ref[...], preferred_element_type=jnp.float32)

    @pl.when(k == 0)
    def _():
        z_ref[...] = acc + b_ref[...]

    @pl.when(k > 0)
    def _():
        z_ref[...] = z_ref[...] + acc


# ---------------------------------------------------------------------------
# Stage 1c: BN affine (precomputed scale/shift) + L2 normalize + positive sims
# ---------------------------------------------------------------------------
def _bn_norm_kernel(z_ref, scale_ref, shift_ref, en_ref, pos_ref):
    e = z_ref[...] * scale_ref[...] + shift_ref[...]          # (2, tm, Dpad) f32
    sq = jnp.sum(e * e, axis=-1, keepdims=True)
    en = e * lax.rsqrt(jnp.maximum(sq, 1e-24))                # L2-normalized rows
    enb = en.astype(en_ref.dtype)                             # bf16 embedding for Stage 2
    en_ref[...] = enb
    # Positive cosine sim of paired rows (r, r+B); computed from the bf16 values so the
    # numerator matches the positive term inside the Stage-2 denominator to ulp level.
    enf = enb.astype(jnp.float32)
    pos_ref[...] = jnp.sum(enf[0] * enf[1], axis=-1, keepdims=True)   # (tm, 1)


# ---------------------------------------------------------------------------
# Stage 2: streamed (flash-style) NT-Xent softmax over key blocks
# ---------------------------------------------------------------------------
def _ntxent_kernel(pos_ref, q_ref, k_ref, loss_ref, m_scr, l_scr, *, tq, tk, inv_tau):
    qi = pl.program_id(0)
    ki = pl.program_id(1)

    @pl.when(ki == 0)
    def _():
        m_scr[...] = jnp.full_like(m_scr, MASK_VAL)
        l_scr[...] = jnp.zeros_like(l_scr)

    # (tq, tk) block of scaled cosine similarities; key operand is pre-transposed in HBM
    # so this is a plain matmul (no per-step vxpose on the XLU).
    sim = jnp.dot(q_ref[...], k_ref[...], preferred_element_type=jnp.float32) * inv_tau

    # Only blocks that intersect the diagonal need the self-mask; everything else runs
    # the cheap unmasked online max/sum path (no iota / compare / select per element).
    on_diag = jnp.logical_and(qi * tq < (ki + 1) * tk, ki * tk < (qi + 1) * tq)

    @pl.when(on_diag)
    def _():
        row = qi * tq + lax.broadcasted_iota(jnp.int32, (tq, tk), 0)
        col = ki * tk + lax.broadcasted_iota(jnp.int32, (tq, tk), 1)
        s = jnp.where(row != col, sim, MASK_VAL)          # mask self column only
        m_new = jnp.maximum(m_scr[...], jnp.max(s, axis=1, keepdims=True))
        p = jnp.exp(s - m_new)                            # exponent <= 0; self -> 0 exactly
        l_scr[...] = jnp.exp(m_scr[...] - m_new) * l_scr[...] + jnp.sum(p, axis=1, keepdims=True)
        m_scr[...] = m_new

    @pl.when(jnp.logical_not(on_diag))
    def _():
        m_new = jnp.maximum(m_scr[...], jnp.max(sim, axis=1, keepdims=True))
        p = jnp.exp(sim - m_new)
        l_scr[...] = jnp.exp(m_scr[...] - m_new) * l_scr[...] + jnp.sum(p, axis=1, keepdims=True)
        m_scr[...] = m_new

    @pl.when(ki == pl.num_programs(1) - 1)
    def _():
        num = jnp.exp(pos_ref[...] * inv_tau - m_scr[...])
        loss_ref[...] = -jnp.log(num / l_scr[...] + TINY_F32)


# ---------------------------------------------------------------------------
# Wrapper
# ---------------------------------------------------------------------------
def _round_up(x, m):
    return ((x + m - 1) // m) * m


def _pick_tile(n, cap, granules):
    """Largest tile <= cap that divides n, trying coarse granules first; fallback: n."""
    cap = min(cap, n)
    for g in granules:
        t = (cap // g) * g
        while t >= g:
            if n % t == 0:
                return t
            t -= g
    return n


def contrastive_loss_pallas(x1, x2, w, b, gamma, beta, *, tau,
                            tq_cap=256, tk_cap=512, rows_cap=256, kin_cap=512):
    batch, in_dim = x1.shape
    out_dim = w.shape[1]
    n = 2 * batch
    d_pad = _round_up(out_dim, 128)
    pad = d_pad - out_dim
    f32 = jnp.float32

    # TODO(synk): for activation-heavy shapes this concat is an extra HBM round trip of
    #             the inputs; feeding x1/x2 separately would remove it (low priority).
    x = jnp.concatenate([x1, x2], axis=0).astype(jnp.bfloat16)              # (2B, in_dim)
    w_p = jnp.pad(w.astype(f32), ((0, 0), (0, pad))).astype(jnp.bfloat16)   # (in_dim, Dpad)
    b_p = jnp.pad(b.astype(f32).reshape(1, -1), ((0, 0), (0, pad)))         # (1, Dpad)
    g_p = jnp.pad(gamma.astype(f32).reshape(1, -1), ((0, 0), (0, pad)))
    bt_p = jnp.pad(beta.astype(f32).reshape(1, -1), ((0, 0), (0, pad)))

    # ---- Stage 1a: gridded linear ------------------------------------------------
    tm = _pick_tile(n, rows_cap, (128, 16))        # bf16 sublane-dim: 16-granular
    tki = _pick_tile(in_dim, kin_cap, (128,))      # lane dim of x block: 128-granular
    z = pl.pallas_call(
        _linear_kernel,
        out_shape=jax.ShapeDtypeStruct((n, d_pad), f32),
        grid_spec=pltpu.PrefetchScalarGridSpec(
            num_scalar_prefetch=0,
            grid=(n // tm, in_dim // tki),
            in_specs=[pl.BlockSpec((tm, tki), lambda i, k: (i, k)),
                      pl.BlockSpec((tki, d_pad), lambda i, k: (k, 0)),
                      pl.BlockSpec((1, d_pad), lambda i, k: (0, 0))],
            out_specs=pl.BlockSpec((tm, d_pad), lambda i, k: (i, 0))),
        compiler_params=pltpu.CompilerParams(
            dimension_semantics=("parallel", "arbitrary"),
            vmem_limit_bytes=VMEM_LIMIT),
    )(x, w_p, b_p)

    # ---- Stage 1b: BatchNorm(train) batch statistics (tiny, column-wise) in XLA ---
    mean = jnp.mean(z, axis=0, keepdims=True)
    var = jnp.mean(jnp.square(z - mean), axis=0, keepdims=True)   # biased (training mode)
    inv_std = lax.rsqrt(var + BN_EPS)
    scale = (g_p * inv_std).reshape(1, 1, d_pad)
    shift = (bt_p - mean * g_p * inv_std).reshape(1, 1, d_pad)

    # ---- Stage 1c: BN affine + L2 normalize + positive sims (paired row blocks) ---
    tmb = _pick_tile(batch, rows_cap, (128, 16))
    z3 = z.reshape(2, batch, d_pad)                # free reshape (row-major)
    en3, pos_half = pl.pallas_call(
        _bn_norm_kernel,
        out_shape=(jax.ShapeDtypeStruct((2, batch, d_pad), jnp.bfloat16),
                   jax.ShapeDtypeStruct((batch, 1), f32)),
        grid_spec=pltpu.PrefetchScalarGridSpec(
            num_scalar_prefetch=0,
            grid=(batch // tmb,),
            in_specs=[pl.BlockSpec((2, tmb, d_pad), lambda i: (0, i, 0)),
                      pl.BlockSpec((1, 1, d_pad), lambda i: (0, 0, 0)),
                      pl.BlockSpec((1, 1, d_pad), lambda i: (0, 0, 0))],
            out_specs=[pl.BlockSpec((2, tmb, d_pad), lambda i: (0, i, 0)),
                       pl.BlockSpec((tmb, 1), lambda i: (i, 0))]),
        compiler_params=pltpu.CompilerParams(
            dimension_semantics=("parallel",),
            vmem_limit_bytes=VMEM_LIMIT),
    )(z3, scale, shift)

    en = en3.reshape(n, d_pad)                                   # (2B, Dpad) bf16 queries
    en_t = en.T                                                  # (Dpad, 2B) bf16 keys
    pos = jnp.concatenate([pos_half, pos_half], axis=0)          # (2B, 1) f32

    # ---- Stage 2: gridded flash-style NT-Xent -------------------------------------
    tq = _pick_tile(n, tq_cap, (128, 16))          # bf16 q-block sublane dim
    tk = _pick_tile(n, tk_cap, (128,))             # lane dim of sim block: 128-granular
    grid = (n // tq, n // tk)
    nt = functools.partial(_ntxent_kernel, tq=tq, tk=tk, inv_tau=1.0 / float(tau))
    per_row = pl.pallas_call(
        nt,
        out_shape=jax.ShapeDtypeStruct((n, 1), f32),
        grid_spec=pltpu.PrefetchScalarGridSpec(
            num_scalar_prefetch=0,
            grid=grid,
            in_specs=[pl.BlockSpec((tq, 1), lambda qi, ki: (qi, 0)),       # positives
                      pl.BlockSpec((tq, d_pad), lambda qi, ki: (qi, 0)),   # query rows
                      pl.BlockSpec((d_pad, tk), lambda qi, ki: (0, ki))],  # key columns
            out_specs=pl.BlockSpec((tq, 1), lambda qi, ki: (qi, 0)),
            scratch_shapes=[pltpu.VMEM((tq, 1), f32),    # running max
                            pltpu.VMEM((tq, 1), f32)]),  # running sum-of-exp
        compiler_params=pltpu.CompilerParams(
            dimension_semantics=("parallel", "arbitrary"),
            vmem_limit_bytes=VMEM_LIMIT),
    )(pos, en, en_t)

    return jnp.sum(per_row) / n


# ---------------------------------------------------------------------------
# Pure-JAX reference of the same forward pass
# ---------------------------------------------------------------------------
def contrastive_loss_ref(x1, x2, w, b, gamma, beta, *, tau):
    hi = lax.Precision.HIGHEST
    z1 = jnp.dot(x1, w, precision=hi) + b
    z2 = jnp.dot(x2, w, precision=hi) + b
    e = jnp.concatenate([z1, z2], axis=0)
    mean = e.mean(axis=0)
    var = ((e - mean) ** 2).mean(axis=0)
    e = (e - mean) / jnp.sqrt(var + BN_EPS) * gamma + beta
    en = e / jnp.linalg.norm(e, axis=-1, keepdims=True)
    sim = jnp.dot(en, en.T, precision=hi) / tau
    n = e.shape[0]
    batch = n // 2
    idx = jnp.arange(n)
    pos_idx = (idx + batch) % n
    pos_val = sim[idx, pos_idx][:, None]
    neg_mask = (idx[None, :] != idx[:, None]) & (idx[None, :] != pos_idx[:, None])
    m = jnp.maximum(pos_val,
                    jnp.max(jnp.where(neg_mask, sim, -jnp.inf), axis=1, keepdims=True))
    num = jnp.exp(pos_val - m)
    den = jnp.sum(jnp.where(neg_mask, jnp.exp(sim - m), 0.0), axis=1, keepdims=True) + num
    return jnp.mean(-jnp.log(num / den + TINY_F32))


if __name__ == "__main__":
    def make_case(key, batch, in_dim, out_dim, default_bn=True, mix=0.9):
        k1, k2, k3, k4, k5, k6 = jax.random.split(key, 6)
        x1 = jax.random.normal(k1, (batch, in_dim), jnp.float32)
        x2 = mix * x1 + (1.0 - mix) * jax.random.normal(k2, (batch, in_dim), jnp.float32)
        bound = 1.0 / (in_dim ** 0.5)
        w = jax.random.uniform(k3, (in_dim, out_dim), jnp.float32, -bound, bound)
        b = jax.random.uniform(k4, (out_dim,), jnp.float32, -bound, bound)
        if default_bn:  # nn.BatchNorm1d default init
            gamma = jnp.ones((out_dim,), jnp.float32)
            beta = jnp.zeros((out_dim,), jnp.float32)
        else:           # "trained" BN params
            gamma = 1.0 + 0.1 * jax.random.normal(k5, (out_dim,), jnp.float32)
            beta = 0.1 * jax.random.normal(k6, (out_dim,), jnp.float32)
        return x1, x2, w, b, gamma, beta

    key = jax.random.PRNGKey(0)
    k_a, k_b = jax.random.split(key)
    # Tolerances account for the bf16 MXU operands (f32 accumulation / f32 elementwise).
    RTOL, ATOL = 2e-2, 5e-3

    # Case 1: small shapes matching the module defaults (degenerate 1x1 grids).
    args = make_case(k_a, 8, 32, 16, default_bn=True, mix=0.9)
    loss = jax.block_until_ready(contrastive_loss_pallas(*args, tau=0.04))
    ref = jax.block_until_ready(contrastive_loss_ref(*args, tau=0.04))
    assert jnp.isfinite(loss), f"non-finite loss: {loss}"
    assert jnp.allclose(loss, ref, rtol=RTOL, atol=ATOL), (loss, ref)

    # Case 2: exercises feature padding (40 -> 128), the K-chunked Stage-1a grid,
    # the paired-row Stage-1c grid, and the multi-block streamed NT-Xent grid
    # (on-diagonal and off-diagonal key blocks, online max/sum across ki).
    args2 = make_case(k_b, 128, 256, 40, default_bn=False, mix=0.5)
    loss2 = jax.block_until_ready(contrastive_loss_pallas(
        *args2, tau=0.07, tq_cap=64, tk_cap=128, rows_cap=64, kin_cap=128))
    ref2 = jax.block_until_ready(contrastive_loss_ref(*args2, tau=0.07))
    assert jnp.isfinite(loss2), f"non-finite loss: {loss2}"
    assert jnp.allclose(loss2, ref2, rtol=RTOL, atol=ATOL), (loss2, ref2)

    print("KERNEL_OK")
</pallas_src>

<mosaic_0001>
module attributes {stable_mosaic.version = 11 : i64} {
  func.func @_linear_kernel(%arg0: i32, %arg1: i32, %arg2: memref<16x32xbf16, #tpu.memory_space<vmem>>, %arg3: memref<32x128xbf16, #tpu.memory_space<vmem>>, %arg4: memref<1x128xf32, #tpu.memory_space<vmem>>, %arg5: memref<16x128xf32, #tpu.memory_space<vmem>>) attributes {dimension_semantics = [#tpu.dimension_semantics<parallel>, #tpu.dimension_semantics<arbitrary>], iteration_bounds = array<i64: 1, 1>, scalar_prefetch = 0 : i64, scratch_operands = 0 : i64, tpu.core_type = #tpu.core_type<tc>, window_params = [{transform_indices = @transform_0, window_bounds = array<i64: 16, 32>}, {transform_indices = @transform_1, window_bounds = array<i64: 32, 128>}, {pipeline_mode = #tpu.pipeline_mode<synchronous>, transform_indices = @transform_2, window_bounds = array<i64: 1, 128>}, {transform_indices = @transform_3, window_bounds = array<i64: 16, 128>}]} {
    %c0 = arith.constant 0 : index
    %c0_0 = arith.constant 0 : index
    %0 = vector.load %arg2[%c0, %c0_0] : memref<16x32xbf16, #tpu.memory_space<vmem>>, vector<16x32xbf16>
    %c0_1 = arith.constant 0 : index
    %c0_2 = arith.constant 0 : index
    %1 = vector.load %arg3[%c0_1, %c0_2] : memref<32x128xbf16, #tpu.memory_space<vmem>>, vector<32x128xbf16>
    %cst = arith.constant dense<0.000000e+00> : vector<16x128xf32>
    %2 = tpu.matmul %0, %1, %cst {dimension_numbers = #tpu.dot_dimension_numbers<[1], [0], [0], [1], [0, 0, 1, 1], [], []>} : vector<16x32xbf16>, vector<32x128xbf16>, vector<16x128xf32> -> vector<16x128xf32>
    %c0_i32 = arith.constant 0 : i32
    %3 = arith.cmpi eq, %arg1, %c0_i32 : i32
    %4 = arith.extui %3 : i1 to i32
    %c0_i32_3 = arith.constant 0 : i32
    %5 = arith.cmpi ne, %4, %c0_i32_3 : i32
    scf.if %5 {
      %c0_6 = arith.constant 0 : index
      %c0_7 = arith.constant 0 : index
      %9 = vector.load %arg4[%c0_6, %c0_7] : memref<1x128xf32, #tpu.memory_space<vmem>>, vector<1x128xf32>
      %10 = vector.broadcast %9 : vector<1x128xf32> to vector<16x128xf32>
      %11 = arith.addf %2, %10 : vector<16x128xf32>
      %c0_8 = arith.constant 0 : index
      %c0_9 = arith.constant 0 : index
      %12 = vector.load %arg5[%c0_8, %c0_9] : memref<16x128xf32, #tpu.memory_space<vmem>>, vector<16x128xf32>
      tpu.vector_store %arg5[%c0_8, %c0_9], %11 {strides = array<i32>} : memref<16x128xf32, #tpu.memory_space<vmem>>, vector<16x128xf32>,
    } else {
    }
    %c0_i32_4 = arith.constant 0 : i32
    %6 = arith.cmpi sgt, %arg1, %c0_i32_4 : i32
    %7 = arith.extui %6 : i1 to i32
    %c0_i32_5 = arith.constant 0 : i32
    %8 = arith.cmpi ne, %7, %c0_i32_5 : i32
    scf.if %8 {
      %c0_6 = arith.constant 0 : index
      %c0_7 = arith.constant 0 : index
      %9 = vector.load %arg5[%c0_6, %c0_7] : memref<16x128xf32, #tpu.memory_space<vmem>>, vector<16x128xf32>
      %10 = arith.addf %9, %2 : vector<16x128xf32>
      %c0_8 = arith.constant 0 : index
      %c0_9 = arith.constant 0 : index
      %11 = vector.load %arg5[%c0_8, %c0_9] : memref<16x128xf32, #tpu.memory_space<vmem>>, vector<16x128xf32>
      tpu.vector_store %arg5[%c0_8, %c0_9], %10 {strides = array<i32>} : memref<16x128xf32, #tpu.memory_space<vmem>>, vector<16x128xf32>,
    } else {
    }
    return
  }
  func.func @transform_0(%arg0: i32, %arg1: i32) -> (i32, i32) {
    %c0_i32 = arith.constant 0 : i32
    return %arg0, %arg1 : i32, i32
  }
  func.func @transform_1(%arg0: i32, %arg1: i32) -> (i32, i32) {
    %c0_i32 = arith.constant 0 : i32
    %c0_i32_0 = arith.constant 0 : i32
    return %arg1, %c0_i32 : i32, i32
  }
  func.func @transform_2(%arg0: i32, %arg1: i32) -> (i32, i32) {
    %c0_i32 = arith.constant 0 : i32
    %c0_i32_0 = arith.constant 0 : i32
    %c0_i32_1 = arith.constant 0 : i32
    return %c0_i32, %c0_i32_0 : i32, i32
  }
  func.func @transform_3(%arg0: i32, %arg1: i32) -> (i32, i32) {
    %c0_i32 = arith.constant 0 : i32
    %c0_i32_0 = arith.constant 0 : i32
    return %arg0, %c0_i32 : i32, i32
  }
}

</mosaic_0001>

<llo_original>
// kernel: tpu_custom_call.1
$region0: #{tpu_custom_call.1}
  #allocation0 [shape = 'u32[]', space=smem, size = 0x4, offset = 0x4, fixed_abs, tag = 'smem constant byte address 0x4 - core index']
  #allocation1 [shape = 'u32[144,128]{1,0:T(1,128)}', space=vmem, size = 0x12000, scoped, tag = 'internal scratch']
  %s0 = inlined_call_operand.hbm [shape: bf16[16,32], index: 0, kind: input, shape index: {}]
  %s1 = inlined_call_operand.hbm [shape: bf16[32,128], index: 1, kind: input, shape index: {}]
  %s2 = inlined_call_operand.vmem [shape: f32[1,128], index: 2, kind: input, shape index: {}]
  %s3 = inlined_call_operand.hbm [shape: f32[16,128], index: 3, kind: output, shape index: {}]
  %s4 = sld [smem:[#allocation0]]
  $region38: #{tpu_custom_call.1} parent=0
    _
  %s6 = ssub.s32 1, %s4
  %s7 = scalar_select 0, %s6, %s4
  $region1: #{tpu_custom_call.1} parent=0
    #allocation2 [shape = 'u8[4096]{0}', space=vmem, size = 0x1000, scoped, tag = 'input window, operand 0, single buffered']
    #allocation3 [shape = 's32[1]{0}', space=sflag, size = 0x4, scoped, tag = 'scoped memory for tpu_custom_call.1']
    #allocation4 [shape = 's32[1]{0}', space=sflag, size = 0x4, scoped, tag = 'scoped memory for tpu_custom_call.1']
    #allocation5 [shape = 'u8[8192]{0}', space=vmem, size = 0x2000, scoped, tag = 'input window, operand 1, single buffered']
    #allocation6 [shape = 's32[1]{0}', space=sflag, size = 0x4, scoped, tag = 'scoped memory for tpu_custom_call.1']
    #allocation7 [shape = 'u8[8192]{0}', space=vmem, size = 0x2000, scoped, tag = 'output window, operand 0, single buffered']
    %8 = vsyncpa [#allocation3], 0
    %9 = vsyncpa [#allocation6], 0
    %10 = vsyncpa [#allocation4], 0
    // Predicated region
    $region2: #{tpu_custom_call.1} parent=1 // pred_check
      _
    $region3: #{tpu_custom_call.1} parent=1 // pred_check_branch
      %12 = sbr.rel (0) target = $region5
    $region4: #{tpu_custom_call.1} parent=1 // pred_region
      %s14 = ssub.s32 128, 128
      %15 = vsyncadd [#allocation3], %s14
      %s16 = sshll.u32 [#allocation2], 4
      %s17 = int_to_ptr.vmem [resolvable:$true] %s16
      %22 = dma.hbm_to_vmem [thread:$0]  %s0, 128, %s17, [#allocation3], 64, 64, 4
    $region5: #{tpu_custom_call.1} parent=1 // pred_fallthru
      _
    // Predicated region
    $region6: #{tpu_custom_call.1} parent=1 // pred_check
      _
    $region7: #{tpu_custom_call.1} parent=1 // pred_check_branch
      %24 = sbr.rel (0) target = $region9
    $region8: #{tpu_custom_call.1} parent=1 // pred_region
      %s26 = ssub.s32 256, 256
      %27 = vsyncadd [#allocation6], %s26
      %s28 = sshll.u32 [#allocation5], 4
      %s29 = int_to_ptr.vmem [resolvable:$true] %s28
      %34 = dma.hbm_to_vmem [thread:$0]  %s1, 256, %s29, [#allocation6], 64, 64, 4
    $region9: #{tpu_custom_call.1} parent=1 // pred_fallthru
      _
    // Predicated region
    $region10: #{tpu_custom_call.1} parent=1 // pred_check
      _
    $region11: #{tpu_custom_call.1} parent=1 // pred_check_branch
      %36 = sbr.rel (0) target = $region13
    $region12: #{tpu_custom_call.1} parent=1 // pred_region
      _
    $region13: #{tpu_custom_call.1} parent=1 // pred_fallthru
      _
    // Predicated region
    $region14: #{tpu_custom_call.1} parent=1 // pred_check
      _
    $region15: #{tpu_custom_call.1} parent=1 // pred_check_branch
      %38 = sbr.rel (0) target = $region17
    $region16: #{tpu_custom_call.1} parent=1 // pred_region
      %39 = dma.done [#allocation3], 128
    $region17: #{tpu_custom_call.1} parent=1 // pred_fallthru
      _
    // Predicated region
    $region18: #{tpu_custom_call.1} parent=1 // pred_check
      _
    $region19: #{tpu_custom_call.1} parent=1 // pred_check_branch
      %41 = sbr.rel (0) target = $region21
    $region20: #{tpu_custom_call.1} parent=1 // pred_region
      %42 = dma.done [#allocation6], 256
    $region21: #{tpu_custom_call.1} parent=1 // pred_fallthru
      _
    %v44 = vld [vmem:[#allocation2] sm:$0xf]
    %v45 = vld [vmem:[#allocation2 + $0x4] sm:$0xf]
    %v46 = vld [vmem:[#allocation5] sm:$0xf]
    %v47 = vld [vmem:[#allocation5 + $0x4] sm:$0xf]
    %v48 = vld [vmem:[#allocation5 + $0x8] sm:$0xf]
    %v49 = vld [vmem:[#allocation5 + $0xc] sm:$0xf]
    %v52 = vunpack.c.l.b16 %v44
    %v53 = vunpack.c.l.b16 %v45
    %v54 = vpack.c.b16 %v53, %v52
    %v59 = vunpack.c.l.b16 %v46
    %v60 = vunpack.c.l.b16 %v47
    %v61 = vunpack.c.l.b16 %v48
    %v62 = vunpack.c.l.b16 %v49
    %v63 = vpack.c.b16 %v60, %v59
    %v64 = vpack.c.b16 %v62, %v61
    %vm67 = vcmask 261120
    %v69 = vsel %vm67, %v54, 0
    %71 = vmatprep.subr.bf16.mxu0 0
    %72 = vmatpush1.bf16.msra.mxu0 %v63
    %73 = vmatprep.subr.bf16.mxu0 0
    %74 = vmatpush1.bf16.msra.mxu0 %v64
    %75 = vmatprep.subr.bf16.mxu0 0
    %76 = vmatpush1.bf16.msra.mxu0 0
    %77 = vmatprep.subr.bf16.mxu0 0
    %78 = vmatpush1.bf16.msra.mxu0 0
    %79 = vmatprep.subr.bf16.mxu0 0
    %80 = vmatpush1.bf16.msra.mxu0 0
    %81 = vmatprep.subr.bf16.mxu0 0
    %82 = vmatpush1.bf16.msra.mxu0 0
    %83 = vmatprep.subr.bf16.mxu0 0
    %84 = vmatpush1.bf16.msra.mxu0 0
    %85 = vmatprep.subr.bf16.mxu0 0
    %86 = vmatpush1.bf16.msra.mxu0 0
    %87 = vmatprep.subr.bf16.mxu0 0
    %88 = vmatpush1.bf16.msra.mxu0 0
    %89 = vmatprep.subr.bf16.mxu0 0
    %90 = vmatpush1.bf16.msra.mxu0 0
    %91 = vmatprep.subr.bf16.mxu0 0
    %92 = vmatpush1.bf16.msra.mxu0 0
    %93 = vmatprep.subr.bf16.mxu0 0
    %94 = vmatpush1.bf16.msra.mxu0 0
    %95 = vmatprep.subr.bf16.mxu0 0
    %96 = vmatpush1.bf16.msra.mxu0 0
    %97 = vmatprep.subr.bf16.mxu0 0
    %98 = vmatpush1.bf16.msra.mxu0 0
    %99 = vmatprep.subr.bf16.mxu0 0
    %100 = vmatpush1.bf16.msra.mxu0 0
    %101 = vmatprep.subr.bf16.mxu0 0
    %102 = vmatpush1.bf16.msra.mxu0 0
    %103 = vmatprep.mubr.bf16.mxu0 0
    %104 = vmatmul.mubr.bf16.gmra.mrb[0].mxu0 %v69
    %v105 = vpop.f32.mrb[0].mxu0
    %v106 = vadd.f32 0.0, %v105
    %v107 = vpop.f32.mrb[0].mxu0
    %v108 = vpop.f32.mrb[0].mxu0
    %v109 = vadd.f32 0.0, %v108
    %v110 = vpop.f32.mrb[0].mxu0
    %111 = vdwg.mxu0
    %p112 = scmp.eq.s32.totalorder 0, 0
    // Predicated region
    $region22: #{tpu_custom_call.1} parent=1 // pred_check
      %p113 = pneg %p112
    $region23: #{tpu_custom_call.1} parent=1 // pred_check_branch
      %115 = sbr.rel (%p113) target = $region25
    $region24: #{tpu_custom_call.1} parent=1 // pred_region
      %v116 = vld [vmem:[%s2] sm:$0x1]
      %v118 = vlaneseq
      %v119 = vshrl.u32 %v118, 7
      %v120 = vsub.s32 0, %v119
      %v121 = vrot.slane %v116, %v120
      %v123 = vadd.f32 %v106, %v121
      %v124 = vadd.f32 %v109, %v121
      %125 = vst [vmem:[#allocation7] sm:$0xff] %v123
      %126 = vst [vmem:[#allocation7 + $0x8] sm:$0xff] %v124
    $region25: #{tpu_custom_call.1} parent=1 // pred_fallthru
      _
    %p127 = scmp.gt.s32.totalorder 0, 0
    // Predicated region
    $region26: #{tpu_custom_call.1} parent=1 // pred_check
      %p128 = pneg %p127
    $region27: #{tpu_custom_call.1} parent=1 // pred_check_branch
      %130 = sbr.rel (%p128) target = $region29
    $region28: #{tpu_custom_call.1} parent=1 // pred_region
      %v131 = vld [vmem:[#allocation7] sm:$0xff]
      %v132 = vld [vmem:[#allocation7 + $0x8] sm:$0xff]
      %v133 = vadd.f32 %v131, %v106
      %v134 = vadd.f32 %v132, %v109
      %135 = vst [vmem:[#allocation7] sm:$0xff] %v133
      %136 = vst [vmem:[#allocation7 + $0x8] sm:$0xff] %v134
    $region29: #{tpu_custom_call.1} parent=1 // pred_fallthru
      _
    // Predicated region
    $region30: #{tpu_custom_call.1} parent=1 // pred_check
      _
    $region31: #{tpu_custom_call.1} parent=1 // pred_check_branch
      %138 = sbr.rel (0) target = $region33
    $region32: #{tpu_custom_call.1} parent=1 // pred_region
      %s140 = ssub.s32 256, 256
      %141 = vsyncadd [#allocation4], %s140
      %s142 = sshll.u32 [#allocation7], 4
      %s143 = int_to_ptr.vmem [resolvable:$true] %s142
      %148 = dma.vmem_to_hbm [thread:$0]  %s143, 256, %s3, [#allocation4], 128, 128, 8
    $region33: #{tpu_custom_call.1} parent=1 // pred_fallthru
      _
    // Predicated region
    $region34: #{tpu_custom_call.1} parent=1 // pred_check
      _
    $region35: #{tpu_custom_call.1} parent=1 // pred_check_branch
      %150 = sbr.rel (0) target = $region37
    $region36: #{tpu_custom_call.1} parent=1 // pred_region
      %151 = dma.done [#allocation4], 256
    $region37: #{tpu_custom_call.1} parent=1 // pred_fallthru
      _
    %152 = vsyncpa [#allocation3], 1
    %153 = vsyncpa [#allocation6], 1
    %154 = vsyncpa [#allocation4], 1

</llo_original>
